<compile_context>
chip_gen: v7x
topology: tpu7x:2x2x1
jax: 0.10.0
libtpu: 0.0.40
codegen_flags: <defaults>
</compile_context>

<pallas_src>
import jax
import jax.numpy as jnp
from jax import lax
from jax.experimental import pallas as pl
from jax.experimental.pallas import tpu as pltpu


def _patch_merge_kernel(even_ref, odd_ref, wa_ref, wb_ref, bias_ref, o_ref):
    # even_ref/odd_ref: (th, Wh, 2C)   wa/wb: (2C, Np)   bias: (1, Np) f32
    # o_ref: (th, Wh, Np)
    th, wh, c2 = even_ref.shape
    rows = th * wh
    inv_n = 1.0 / (2.0 * c2)                 # LayerNorm width is 4C = 2 * (2C)

    xe = even_ref[...].reshape(rows, c2).astype(jnp.float32)
    xo = odd_ref[...].reshape(rows, c2).astype(jnp.float32)

    # One-pass LayerNorm statistics over the (split) 4C channels, in f32.
    s1 = jnp.sum(xe, axis=-1, keepdims=True) + jnp.sum(xo, axis=-1, keepdims=True)
    s2 = (jnp.sum(xe * xe, axis=-1, keepdims=True)
          + jnp.sum(xo * xo, axis=-1, keepdims=True))
    mean = s1 * inv_n
    var = s2 * inv_n - mean * mean
    inv = lax.rsqrt(var + 1e-5)              # PyTorch LayerNorm default eps

    # gamma/beta are already folded into wa/wb/bias; cast to the MXU dtype.
    ye = ((xe - mean) * inv).astype(wa_ref.dtype)
    yo = ((xo - mean) * inv).astype(wb_ref.dtype)

    acc = jnp.dot(ye, wa_ref[...], preferred_element_type=jnp.float32)
    acc = acc + jnp.dot(yo, wb_ref[...], preferred_element_type=jnp.float32)
    acc = acc + bias_ref[...]
    o_ref[...] = acc.reshape(th, wh, -1).astype(o_ref.dtype)


def patch_merging(x, gamma, beta, w_red, input_resolution, *, block_rows=512):
    """Fused PatchMerging forward.

    x:      (B, H*W, C)  channels-last, same as the PyTorch module.
    gamma:  (4C,)  LayerNorm weight.
    beta:   (4C,)  LayerNorm bias.
    w_red:  (4C, 2C)  reduction weight, pre-transposed (torch stores (2C, 4C)).
    Returns (B, H/2*W/2, 2C).
    """
    H, W = input_resolution
    B, L, C = x.shape
    assert L == H * W, "input feature has wrong size"
    assert H % 2 == 0 and W % 2 == 0, f"x size ({H}*{W}) are not even."

    Hh, Wh = H // 2, W // 2
    rows_h = B * Hh
    C2 = 2 * C
    N = 2 * C                                # output channels

    # Single free reshape: fold W-parity into channels, expose H-parity.
    #   xr[b*Hh+hh, ph, wh, pw*C + c] == x[b, (2*hh+ph)*W + (2*wh+pw), c]
    xr = x.reshape(rows_h, 2, Wh, C2)

    # Fold gamma into the reduction weight and beta into a bias (done once on
    # the tiny parameter tensors, in f32).  The in-kernel channel order is
    # [x0, x2 | x1, x3] (even-h half, odd-h half); permute params to match the
    # PyTorch concat order [x0, x1, x2, x3].
    g32 = gamma.astype(jnp.float32)
    w32 = w_red.astype(jnp.float32)
    ge = jnp.concatenate([g32[0:C], g32[2 * C:3 * C]])
    go = jnp.concatenate([g32[C:2 * C], g32[3 * C:4 * C]])
    we = jnp.concatenate([w32[0:C], w32[2 * C:3 * C]], axis=0)
    wo = jnp.concatenate([w32[C:2 * C], w32[3 * C:4 * C]], axis=0)
    wa = ge[:, None] * we                    # (2C, N)
    wb = go[:, None] * wo                    # (2C, N)
    bias = beta.astype(jnp.float32) @ w32    # (N,)

    # Lane-dense output: pad output channels to a multiple of 128.
    Np = ((N + 127) // 128) * 128
    if Np != N:
        wa = jnp.pad(wa, ((0, 0), (0, Np - N)))
        wb = jnp.pad(wb, ((0, 0), (0, Np - N)))
        bias = jnp.pad(bias, (0, Np - N))
    wa = wa.astype(x.dtype)                  # MXU matmul runs in the input dtype
    wb = wb.astype(x.dtype)
    bias = bias.reshape(1, Np)               # stays f32

    # Row tile: ~block_rows output rows per grid step, expressed in H/2 rows.
    # Pick a divisor of rows_h so there are no ragged tail blocks.
    th = max(1, min(rows_h, max(1, block_rows // Wh)))
    while rows_h % th != 0:
        th -= 1

    bpe = jnp.dtype(x.dtype).itemsize
    tile_rows = th * Wh
    vmem_bytes = (
        2 * 2 * tile_rows * C2 * bpe         # even + odd inputs, double-buffered
        + 2 * tile_rows * Np * bpe           # output, double-buffered
        + 2 * 2 * C2 * Np * bpe              # wa + wb, double-buffered
        + 2 * Np * 4                         # bias
    )
    vmem_limit = int(min(max(vmem_bytes + (4 << 20), 16 << 20), 64 << 20))

    out = pl.pallas_call(
        _patch_merge_kernel,
        out_shape=jax.ShapeDtypeStruct((rows_h, Wh, Np), x.dtype),
        grid_spec=pltpu.PrefetchScalarGridSpec(
            num_scalar_prefetch=0,
            grid=(rows_h // th,),
            in_specs=[
                pl.BlockSpec((th, None, Wh, C2), lambda i: (i, 0, 0, 0)),  # even h
                pl.BlockSpec((th, None, Wh, C2), lambda i: (i, 1, 0, 0)),  # odd h
                pl.BlockSpec((C2, Np), lambda i: (0, 0)),
                pl.BlockSpec((C2, Np), lambda i: (0, 0)),
                pl.BlockSpec((1, Np), lambda i: (0, 0)),
            ],
            out_specs=pl.BlockSpec((th, Wh, Np), lambda i: (i, 0, 0)),
        ),
        compiler_params=pltpu.CompilerParams(
            dimension_semantics=("parallel",),
            vmem_limit_bytes=vmem_limit,
        ),
    )(xr, xr, wa, wb, bias)

    out = out.reshape(B, Hh * Wh, Np)
    if Np != N:
        out = out[:, :, :N]
    return out


def reference(x, gamma, beta, w_red, input_resolution):
    """Pure-JAX reference mirroring the PyTorch forward (unfused, two-pass LN)."""
    H, W = input_resolution
    B, L, C = x.shape
    xv = x.reshape(B, H, W, C)
    x0 = xv[:, 0::2, 0::2, :]
    x1 = xv[:, 1::2, 0::2, :]
    x2 = xv[:, 0::2, 1::2, :]
    x3 = xv[:, 1::2, 1::2, :]
    xm = jnp.concatenate([x0, x1, x2, x3], axis=-1).reshape(B, -1, 4 * C)
    mean = jnp.mean(xm, axis=-1, keepdims=True)
    var = jnp.mean((xm - mean) ** 2, axis=-1, keepdims=True)
    xn = (xm - mean) / jnp.sqrt(var + 1e-5) * gamma + beta
    return xn @ w_red


if __name__ == "__main__":
    # Small shapes: B=2, C=4, H=W=16  ->  x: (2, 256, 4)
    B, C, H, W = 2, 4, 16, 16
    key = jax.random.PRNGKey(0)
    kx, kw, kg, kb = jax.random.split(key, 4)

    x = jax.random.normal(kx, (B, H * W, C), dtype=jnp.float32)

    # nn.Linear(4*dim, 2*dim, bias=False): torch weight is (2C, 4C); stored
    # pre-transposed as (4C, 2C) so the kernel computes y @ W directly.
    w_red = jax.random.normal(kw, (4 * C, 2 * C), dtype=jnp.float32) * 0.05
    gamma = 1.0 + 0.1 * jax.random.normal(kg, (4 * C,), dtype=jnp.float32)
    beta = 0.1 * jax.random.normal(kb, (4 * C,), dtype=jnp.float32)

    # block_rows=64 -> th=8, grid=(2,): exercises multi-step tiling at small shapes.
    out = patch_merging(x, gamma, beta, w_red, (H, W), block_rows=64)
    out = jax.block_until_ready(out)

    ref = reference(x, gamma, beta, w_red, (H, W))
    assert out.shape == (B, (H // 2) * (W // 2), 2 * C)
    assert jnp.allclose(out, ref, atol=1e-4, rtol=1e-4)

    print("KERNEL_OK")
</pallas_src>

<mosaic_0001>
module attributes {stable_mosaic.version = 11 : i64} {
  func.func @_patch_merge_kernel(%arg0: i32, %arg1: memref<8x1x8x8xf32, #tpu.memory_space<vmem>>, %arg2: memref<8x1x8x8xf32, #tpu.memory_space<vmem>>, %arg3: memref<8x128xf32, #tpu.memory_space<vmem>>, %arg4: memref<8x128xf32, #tpu.memory_space<vmem>>, %arg5: memref<1x128xf32, #tpu.memory_space<vmem>>, %arg6: memref<8x8x128xf32, #tpu.memory_space<vmem>>) attributes {dimension_semantics = [#tpu.dimension_semantics<parallel>], iteration_bounds = array<i64: 2>, scalar_prefetch = 0 : i64, scratch_operands = 0 : i64, tpu.core_type = #tpu.core_type<tc>, window_params = [{transform_indices = @transform_0, window_bounds = array<i64: 8, 1, 8, 8>}, {transform_indices = @transform_1, window_bounds = array<i64: 8, 1, 8, 8>}, {pipeline_mode = #tpu.pipeline_mode<synchronous>, transform_indices = @transform_2, window_bounds = array<i64: 8, 128>}, {pipeline_mode = #tpu.pipeline_mode<synchronous>, transform_indices = @transform_3, window_bounds = array<i64: 8, 128>}, {pipeline_mode = #tpu.pipeline_mode<synchronous>, transform_indices = @transform_4, window_bounds = array<i64: 1, 128>}, {transform_indices = @transform_5, window_bounds = array<i64: 8, 8, 128>}]} {
    %c0 = arith.constant 0 : index
    %c0_0 = arith.constant 0 : index
    %c0_1 = arith.constant 0 : index
    %c0_2 = arith.constant 0 : index
    %0 = vector.load %arg1[%c0, %c0_0, %c0_1, %c0_2] : memref<8x1x8x8xf32, #tpu.memory_space<vmem>>, vector<8x1x8x8xf32>
    %1 = vector.shape_cast %0 : vector<8x1x8x8xf32> to vector<8x8x8xf32>
    %2 = vector.shape_cast %1 : vector<8x8x8xf32> to vector<64x8xf32>
    %c0_3 = arith.constant 0 : index
    %c0_4 = arith.constant 0 : index
    %c0_5 = arith.constant 0 : index
    %c0_6 = arith.constant 0 : index
    %3 = vector.load %arg2[%c0_3, %c0_4, %c0_5, %c0_6] : memref<8x1x8x8xf32, #tpu.memory_space<vmem>>, vector<8x1x8x8xf32>
    %4 = vector.shape_cast %3 : vector<8x1x8x8xf32> to vector<8x8x8xf32>
    %5 = vector.shape_cast %4 : vector<8x8x8xf32> to vector<64x8xf32>
    %cst = arith.constant dense<0.000000e+00> : vector<64xf32>
    %6 = vector.multi_reduction <add>, %2, %cst [1] : vector<64x8xf32> to vector<64xf32>
    %7 = vector.shape_cast %6 : vector<64xf32> to vector<64x1xf32>
    %cst_7 = arith.constant dense<0.000000e+00> : vector<64xf32>
    %8 = vector.multi_reduction <add>, %5, %cst_7 [1] : vector<64x8xf32> to vector<64xf32>
    %9 = vector.shape_cast %8 : vector<64xf32> to vector<64x1xf32>
    %10 = arith.addf %7, %9 : vector<64x1xf32>
    %11 = arith.mulf %2, %2 : vector<64x8xf32>
    %cst_8 = arith.constant dense<0.000000e+00> : vector<64xf32>
    %12 = vector.multi_reduction <add>, %11, %cst_8 [1] : vector<64x8xf32> to vector<64xf32>
    %13 = vector.shape_cast %12 : vector<64xf32> to vector<64x1xf32>
    %14 = arith.mulf %5, %5 : vector<64x8xf32>
    %cst_9 = arith.constant dense<0.000000e+00> : vector<64xf32>
    %15 = vector.multi_reduction <add>, %14, %cst_9 [1] : vector<64x8xf32> to vector<64xf32>
    %16 = vector.shape_cast %15 : vector<64xf32> to vector<64x1xf32>
    %17 = arith.addf %13, %16 : vector<64x1xf32>
    %cst_10 = arith.constant 6.250000e-02 : f32
    %18 = vector.broadcast %cst_10 : f32 to vector<64x1xf32>
    %19 = arith.mulf %10, %18 : vector<64x1xf32>
    %cst_11 = arith.constant 6.250000e-02 : f32
    %20 = vector.broadcast %cst_11 : f32 to vector<64x1xf32>
    %21 = arith.mulf %17, %20 : vector<64x1xf32>
    %22 = arith.mulf %19, %19 : vector<64x1xf32>
    %23 = arith.subf %21, %22 : vector<64x1xf32>
    %cst_12 = arith.constant 9.99999974E-6 : f32
    %24 = vector.broadcast %cst_12 : f32 to vector<64x1xf32>
    %25 = arith.addf %23, %24 : vector<64x1xf32>
    %26 = math.rsqrt %25 : vector<64x1xf32>
    %27 = vector.broadcast %19 : vector<64x1xf32> to vector<64x8xf32>
    %28 = arith.subf %2, %27 : vector<64x8xf32>
    %29 = vector.broadcast %26 : vector<64x1xf32> to vector<64x8xf32>
    %30 = arith.mulf %28, %29 : vector<64x8xf32>
    %31 = vector.broadcast %19 : vector<64x1xf32> to vector<64x8xf32>
    %32 = arith.subf %5, %31 : vector<64x8xf32>
    %33 = vector.broadcast %26 : vector<64x1xf32> to vector<64x8xf32>
    %34 = arith.mulf %32, %33 : vector<64x8xf32>
    %c0_13 = arith.constant 0 : index
    %c0_14 = arith.constant 0 : index
    %35 = vector.load %arg3[%c0_13, %c0_14] : memref<8x128xf32, #tpu.memory_space<vmem>>, vector<8x128xf32>
    %cst_15 = arith.constant dense<0.000000e+00> : vector<64x128xf32>
    %36 = tpu.matmul %30, %35, %cst_15 {dimension_numbers = #tpu.dot_dimension_numbers<[1], [0], [0], [1], [0, 0, 1, 1], [], []>} : vector<64x8xf32>, vector<8x128xf32>, vector<64x128xf32> -> vector<64x128xf32>
    %c0_16 = arith.constant 0 : index
    %c0_17 = arith.constant 0 : index
    %37 = vector.load %arg4[%c0_16, %c0_17] : memref<8x128xf32, #tpu.memory_space<vmem>>, vector<8x128xf32>
    %cst_18 = arith.constant dense<0.000000e+00> : vector<64x128xf32>
    %38 = tpu.matmul %34, %37, %cst_18 {dimension_numbers = #tpu.dot_dimension_numbers<[1], [0], [0], [1], [0, 0, 1, 1], [], []>} : vector<64x8xf32>, vector<8x128xf32>, vector<64x128xf32> -> vector<64x128xf32>
    %39 = arith.addf %36, %38 : vector<64x128xf32>
    %c0_19 = arith.constant 0 : index
    %c0_20 = arith.constant 0 : index
    %40 = vector.load %arg5[%c0_19, %c0_20] : memref<1x128xf32, #tpu.memory_space<vmem>>, vector<1x128xf32>
    %41 = vector.broadcast %40 : vector<1x128xf32> to vector<64x128xf32>
    %42 = arith.addf %39, %41 : vector<64x128xf32>
    %43 = vector.shape_cast %42 : vector<64x128xf32> to vector<8x8x128xf32>
    %c0_21 = arith.constant 0 : index
    %c0_22 = arith.constant 0 : index
    %c0_23 = arith.constant 0 : index
    %44 = vector.load %arg6[%c0_21, %c0_22, %c0_23] : memref<8x8x128xf32, #tpu.memory_space<vmem>>, vector<8x8x128xf32>
    tpu.vector_store %arg6[%c0_21, %c0_22, %c0_23], %43 {strides = array<i32>} : memref<8x8x128xf32, #tpu.memory_space<vmem>>, vector<8x8x128xf32>,
    return
  }
  func.func @transform_0(%arg0: i32) -> (i32, i32, i32, i32) {
    %c0_i32 = arith.constant 0 : i32
    %c0_i32_0 = arith.constant 0 : i32
    %c0_i32_1 = arith.constant 0 : i32
    %c0_i32_2 = arith.constant 0 : i32
    return %arg0, %c0_i32, %c0_i32_0, %c0_i32_1 : i32, i32, i32, i32
  }
  func.func @transform_1(%arg0: i32) -> (i32, i32, i32, i32) {
    %c1_i32 = arith.constant 1 : i32
    %c0_i32 = arith.constant 0 : i32
    %c0_i32_0 = arith.constant 0 : i32
    %c0_i32_1 = arith.constant 0 : i32
    return %arg0, %c1_i32, %c0_i32, %c0_i32_0 : i32, i32, i32, i32
  }
  func.func @transform_2(%arg0: i32) -> (i32, i32) {
    %c0_i32 = arith.constant 0 : i32
    %c0_i32_0 = arith.constant 0 : i32
    %c0_i32_1 = arith.constant 0 : i32
    return %c0_i32, %c0_i32_0 : i32, i32
  }
  func.func @transform_3(%arg0: i32) -> (i32, i32) {
    %c0_i32 = arith.constant 0 : i32
    %c0_i32_0 = arith.constant 0 : i32
    %c0_i32_1 = arith.constant 0 : i32
    return %c0_i32, %c0_i32_0 : i32, i32
  }
  func.func @transform_4(%arg0: i32) -> (i32, i32) {
    %c0_i32 = arith.constant 0 : i32
    %c0_i32_0 = arith.constant 0 : i32
    %c0_i32_1 = arith.constant 0 : i32
    return %c0_i32, %c0_i32_0 : i32, i32
  }
  func.func @transform_5(%arg0: i32) -> (i32, i32, i32) {
    %c0_i32 = arith.constant 0 : i32
    %c0_i32_0 = arith.constant 0 : i32
    %c0_i32_1 = arith.constant 0 : i32
    return %arg0, %c0_i32, %c0_i32_0 : i32, i32, i32
  }
}

</mosaic_0001>

<llo_original>
// kernel: tpu_custom_call.1
$region0: #{tpu_custom_call.1}
  #allocation0 [shape = 'u32[]', space=smem, size = 0x4, offset = 0x4, fixed_abs, tag = 'smem constant byte address 0x4 - core index']
  #allocation1 [shape = 'u32[144,128]{1,0:T(1,128)}', space=vmem, size = 0x12000, scoped, tag = 'internal scratch']
  %s0 = inlined_call_operand.vmem [shape: f32[16,2,8,8], index: 0, kind: input, shape index: {}]
  %s1 = inlined_call_operand.vmem [shape: f32[16,2,8,8], index: 1, kind: input, shape index: {}]
  %s2 = inlined_call_operand.vmem [shape: f32[8,128], index: 2, kind: input, shape index: {}]
  %s3 = inlined_call_operand.vmem [shape: f32[8,128], index: 3, kind: input, shape index: {}]
  %s4 = inlined_call_operand.vmem [shape: f32[1,128], index: 4, kind: input, shape index: {}]
  %s5 = inlined_call_operand.hbm [shape: f32[16,8,128], index: 5, kind: output, shape index: {}]
  %s6 = sld [smem:[#allocation0]]
  $region129: #{tpu_custom_call.1} parent=0
    _
  %s8 = ssub.s32 1, %s6
  %s9 = scalar_select 0, %s8, %s6
  $region1: #{tpu_custom_call.1} parent=0
    #allocation2 [shape = 'u8[65536]{0}', space=vmem, size = 0x10000, scoped, tag = 'input window, operand 0']
    #allocation3 [shape = 'u8[65536]{0}', space=vmem, size = 0x10000, scoped, tag = 'input window, operand 1']
    #allocation4 [shape = 'u8[65536]{0}', space=vmem, size = 0x10000, scoped, tag = 'output window, operand 0']
    #allocation5 [shape = 's32[2]{0}', space=sflag, size = 0x8, scoped, tag = 'scoped memory for tpu_custom_call.1']
    %10 = vsyncpa [#allocation5], 0
    %s11 = scalar_lea.sflag [#allocation5], 1
    %12 = vsyncpa %s11, 0
    loop: start=0, step=1, limit=4
    $region2: #{tpu_custom_call.1} parent=1 // loop_pre_header
      _
    $region3: #{tpu_custom_call.1} parent=1 // loop_header
      %s14 = sphi 0, %s18
      %p15 = scmp.ge.s32.totalorder %s14, 4
      %s24 = sphi 0, %s26
      %s27 = sphi 0, %s24
      %s28 = sphi 0, %s27
      %s44 = sphi 0, %s28
      %s50 = sphi 0, %s52
      %s53 = sphi 0, %s50
      %s54 = sphi 0, %s53
      %s70 = sphi 0, %s54
      %s74 = sphi 0, %s74
      %s76 = sphi 0, %s74
      %s77 = sphi 0, %s76
      %s91 = sphi 0, %s77
      %s95 = sphi 0, %s95
      %s97 = sphi 0, %s95
      %s98 = sphi 0, %s97
      %s112 = sphi 0, %s98
      %s116 = sphi 0, %s116
      %s118 = sphi 0, %s116
      %s119 = sphi 0, %s118
      %s133 = sphi 0, %s119
      %s139 = sphi 0, %s141
      %s142 = sphi 0, %s139
      %s143 = sphi 0, %s142
      %s159 = sphi 0, %s143
    $region4: #{tpu_custom_call.1} parent=1 // loop_header_branch
      %17 = sbr.rel (%p15) target = $region8
    $region5: #{tpu_custom_call.1} parent=1 // loop_body
      %s19 = ssub.s32 %s14, 1
      %s20 = ssub.s32 %s14, 2
      %s21 = sadd.s32 %s14, 1
      %s22 = ssub.s32 %s14, %s21
      %p23 = scmp.eq.s32.totalorder %s22, 0
      %s25 = sadd.s32 %s24, 1
      %s26 = scalar_select %p23, %s24, %s25
      %p29 = pneg %p23
      %p30 = scmp.eq.s32.totalorder %s14, 1
      %p31 = por %p29, %p30
      %p32 = scmp.ne.s32.totalorder %s24, %s27
      %p33 = scmp.eq.s32.totalorder %s14, 0
      %p34 = por %p32, %p33
      %p35 = scmp.ne.s32.totalorder %s24, %s27
      %p36 = scmp.eq.s32.totalorder %s19, 1
      %p37 = por %p35, %p36
      %p38 = scmp.ne.s32.totalorder %s27, %s28
      %p39 = scmp.eq.s32.totalorder %s19, 0
      %p40 = por %p38, %p39
      %p41 = scmp.ne.s32.totalorder %s27, %s28
      %p42 = scmp.eq.s32.totalorder %s20, 1
      %p43 = por %p41, %p42
      %p45 = scmp.ne.s32.totalorder %s28, %s44
      %p46 = scmp.eq.s32.totalorder %s20, 0
      %p47 = por %p45, %p46
      %s48 = ssub.s32 %s14, %s21
      %p49 = scmp.eq.s32.totalorder %s48, 0
      %s51 = sadd.s32 %s50, 1
      %s52 = scalar_select %p49, %s50, %s51
      %p55 = pneg %p49
      %p56 = scmp.eq.s32.totalorder %s14, 1
      %p57 = por %p55, %p56
      %p58 = scmp.ne.s32.totalorder %s50, %s53
      %p59 = scmp.eq.s32.totalorder %s14, 0
      %p60 = por %p58, %p59
      %p61 = scmp.ne.s32.totalorder %s50, %s53
      %p62 = scmp.eq.s32.totalorder %s19, 1
      %p63 = por %p61, %p62
      %p64 = scmp.ne.s32.totalorder %s53, %s54
      %p65 = scmp.eq.s32.totalorder %s19, 0
      %p66 = por %p64, %p65
      %p67 = scmp.ne.s32.totalorder %s53, %s54
      %p68 = scmp.eq.s32.totalorder %s20, 1
      %p69 = por %p67, %p68
      %p71 = scmp.ne.s32.totalorder %s54, %s70
      %p72 = scmp.eq.s32.totalorder %s20, 0
      %p73 = por %p71, %p72
      %s75 = sadd.s32 %s74, 1
      %p78 = scmp.eq.s32.totalorder %s14, 1
      %p79 = scmp.ne.s32.totalorder %s74, %s76
      %p80 = scmp.eq.s32.totalorder %s14, 0
      %p81 = por %p79, %p80
      %p82 = scmp.ne.s32.totalorder %s74, %s76
      %p83 = scmp.eq.s32.totalorder %s19, 1
      %p84 = por %p82, %p83
      %p85 = scmp.ne.s32.totalorder %s76, %s77
      %p86 = scmp.eq.s32.totalorder %s19, 0
      %p87 = por %p85, %p86
      %p88 = scmp.ne.s32.totalorder %s76, %s77
      %p89 = scmp.eq.s32.totalorder %s20, 1
      %p90 = por %p88, %p89
      %p92 = scmp.ne.s32.totalorder %s77, %s91
      %p93 = scmp.eq.s32.totalorder %s20, 0
      %p94 = por %p92, %p93
      %s96 = sadd.s32 %s95, 1
      %p99 = scmp.eq.s32.totalorder %s14, 1
      %p100 = scmp.ne.s32.totalorder %s95, %s97
      %p101 = scmp.eq.s32.totalorder %s14, 0
      %p102 = por %p100, %p101
      %p103 = scmp.ne.s32.totalorder %s95, %s97
      %p104 = scmp.eq.s32.totalorder %s19, 1
      %p105 = por %p103, %p104
      %p106 = scmp.ne.s32.totalorder %s97, %s98
      %p107 = scmp.eq.s32.totalorder %s19, 0
      %p108 = por %p106, %p107
      %p109 = scmp.ne.s32.totalorder %s97, %s98
      %p110 = scmp.eq.s32.totalorder %s20, 1
      %p111 = por %p109, %p110
      %p113 = scmp.ne.s32.totalorder %s98, %s112
      %p114 = scmp.eq.s32.totalorder %s20, 0
      %p115 = por %p113, %p114
      %s117 = sadd.s32 %s116, 1
      %p120 = scmp.eq.s32.totalorder %s14, 1
      %p121 = scmp.ne.s32.totalorder %s116, %s118
      %p122 = scmp.eq.s32.totalorder %s14, 0
      %p123 = por %p121, %p122
      %p124 = scmp.ne.s32.totalorder %s116, %s118
      %p125 = scmp.eq.s32.totalorder %s19, 1
      %p126 = por %p124, %p125
      %p127 = scmp.ne.s32.totalorder %s118, %s119
      %p128 = scmp.eq.s32.totalorder %s19, 0
      %p129 = por %p127, %p128
      %p130 = scmp.ne.s32.totalorder %s118, %s119
      %p131 = scmp.eq.s32.totalorder %s20, 1
      %p132 = por %p130, %p131
      %p134 = scmp.ne.s32.totalorder %s119, %s133
      %p135 = scmp.eq.s32.totalorder %s20, 0
      %p136 = por %p134, %p135
      %s137 = ssub.s32 %s14, %s21
      %p138 = scmp.eq.s32.totalorder %s137, 0
      %s140 = sadd.s32 %s139, 1
      %s141 = scalar_select %p138, %s139, %s140
      %p144 = pneg %p138
      %p145 = scmp.eq.s32.totalorder %s14, 1
      %p146 = por %p144, %p145
      %p147 = scmp.ne.s32.totalorder %s139, %s142
      %p148 = scmp.eq.s32.totalorder %s14, 0
      %p149 = por %p147, %p148
      %p150 = scmp.ne.s32.totalorder %s139, %s142
      %p151 = scmp.eq.s32.totalorder %s19, 1
      %p152 = por %p150, %p151
      %p153 = scmp.ne.s32.totalorder %s142, %s143
      %p154 = scmp.eq.s32.totalorder %s19, 0
      %p155 = por %p153, %p154
      %p156 = scmp.ne.s32.totalorder %s142, %s143
      %p157 = scmp.eq.s32.totalorder %s20, 1
      %p158 = por %p156, %p157
      %p160 = scmp.ne.s32.totalorder %s143, %s159
      %p161 = scmp.eq.s32.totalorder %s20, 0
      %p162 = por %p160, %p161
      %p163 = scmp.le.s32.totalorder 1, %s14
      %p164 = scmp.lt.s32.totalorder %s14, 3
      %p165 = pnand %p163, %p164
      %p166 = pneg %p165
      // Predicated region
      $region9: #{tpu_custom_call.1} parent=5 // pred_check
        _
      $region10: #{tpu_custom_call.1} parent=5 // pred_check_branch
        %168 = sbr.rel (%p165) target = $region12
      $region11: #{tpu_custom_call.1} parent=5 // pred_region
        %s169 = ssub.s32 %s14, 1
        // Predicated region
        $region13: #{tpu_custom_call.1} parent=11 // pred_check
          %p170 = pneg %p87
        $region14: #{tpu_custom_call.1} parent=11 // pred_check_branch
          %172 = sbr.rel (%p170) target = $region16
        $region15: #{tpu_custom_call.1} parent=11 // pred_region
          _
        $region16: #{tpu_custom_call.1} parent=11 // pred_fallthru
          _
        // Predicated region
        $region17: #{tpu_custom_call.1} parent=11 // pred_check
          %p173 = pneg %p108
        $region18: #{tpu_custom_call.1} parent=11 // pred_check_branch
          %175 = sbr.rel (%p173) target = $region20
        $region19: #{tpu_custom_call.1} parent=11 // pred_region
          _
        $region20: #{tpu_custom_call.1} parent=11 // pred_fallthru
          _
        // Predicated region
        $region21: #{tpu_custom_call.1} parent=11 // pred_check
          %p176 = pneg %p129
        $region22: #{tpu_custom_call.1} parent=11 // pred_check_branch
          %178 = sbr.rel (%p176) target = $region24
        $region23: #{tpu_custom_call.1} parent=11 // pred_region
          _
        $region24: #{tpu_custom_call.1} parent=11 // pred_fallthru
          _
      $region12: #{tpu_custom_call.1} parent=5 // pred_fallthru
        _
      %p179 = scmp.lt.s32.totalorder %s14, 2
      // Predicated region
      $region25: #{tpu_custom_call.1} parent=5 // pred_check
        %p180 = pneg %p179
      $region26: #{tpu_custom_call.1} parent=5 // pred_check_branch
        %182 = sbr.rel (%p180) target = $region28
      $region27: #{tpu_custom_call.1} parent=5 // pred_region
        // Predicated region
        $region29: #{tpu_custom_call.1} parent=27 // pred_check
          %p183 = pneg %p34
        $region30: #{tpu_custom_call.1} parent=27 // pred_check_branch
          %185 = sbr.rel (%p183) target = $region32
        $region31: #{tpu_custom_call.1} parent=27 // pred_region
          %s186 = sand.u32 %s24, 1
          %s187 = sand.u32 %s24, 1
          %s188 = smul.addr %s187, 64
          %s189 = scalar_lea.vmem [#allocation2], %s188
          %s190 = smul.u32 8, %s14
          %s191 = smul.addr %s190, 2
          %s192 = smul.addr %s191, 8
          %s193 = scalar_lea.vmem %s0, %s192
          // Predicated region
          $region33: #{tpu_custom_call.1} parent=31 // pred_check
            _
          $region34: #{tpu_custom_call.1} parent=31 // pred_check_branch
            %195 = sbr.rel (0) target = $region36
          $region35: #{tpu_custom_call.1} parent=31 // pred_region
            // Predicated region
            $region37: #{tpu_custom_call.1} parent=35 // pred_check
              _
            $region38: #{tpu_custom_call.1} parent=35 // pred_check_branch
              %197 = sbr.rel (0) target = $region40
            $region39: #{tpu_custom_call.1} parent=35 // pred_region
              // Predicated region
              $region52: #{tpu_custom_call.1} parent=39 // pred_check
                _
              $region53: #{tpu_custom_call.1} parent=39 // pred_check_branch
                %226 = sbr.rel (0) target = $region55
              $region54: #{tpu_custom_call.1} parent=39 // pred_region
                loop: start=0, step=1, limit=1
                $region56: #{tpu_custom_call.1} parent=54 // loop_pre_header
                  _
                $region57: #{tpu_custom_call.1} parent=54 // loop_header
                  %s228 = sphi 0, %s232
                  %p229 = scmp.ge.s32.totalorder %s228, 1
                  %s233 = sphi %s193, %s193
                  %s234 = sphi %s189, %s189
                $region58: #{tpu_custom_call.1} parent=54 // loop_header_branch
                  %231 = sbr.rel (%p229) target = $region62
                $region59: #{tpu_custom_call.1} parent=54 // loop_body
                  %v235 = vld [vmem:[%s233] sm:$0xff]
                  %236 = vst [vmem:[%s234] sm:$0xff] %v235
                  %v237 = vld [vmem:[%s233 + $0x10] sm:$0xff]
                  %238 = vst [vmem:[%s234 + $0x8] sm:$0xff] %v237
                  %v239 = vld [vmem:[%s233 + $0x20] sm:$0xff]
                  %240 = vst [vmem:[%s234 + $0x10] sm:$0xff] %v239
                  %v241 = vld [vmem:[%s233 + $0x30] sm:$0xff]
                  %242 = vst [vmem:[%s234 + $0x18] sm:$0xff] %v241
                  %v243 = vld [vmem:[%s233 + $0x40] sm:$0xff]
                  %244 = vst [vmem:[%s234 + $0x20] sm:$0xff] %v243
                  %v245 = vld [vmem:[%s233 + $0x50] sm:$0xff]
                  %246 = vst [vmem:[%s234 + $0x28] sm:$0xff] %v245
                  %v247 = vld [vmem:[%s233 + $0x60] sm:$0xff]
                  %248 = vst [vmem:[%s234 + $0x30] sm:$0xff] %v247
                  %v249 = vld [vmem:[%s233 + $0x70] sm:$0xff]
                  %250 = vst [vmem:[%s234 + $0x38] sm:$0xff] %v249
                $region60: #{tpu_custom_call.1} parent=54 // loop_footer
                  %s232 = sadd.s32 1, %s228
                $region61: #{tpu_custom_call.1} parent=54 // loop_footer_branch
                  %227 = sbr.rel target = $region57
                $region62: #{tpu_custom_call.1} parent=54 // loop_exit
                  _
              $region55: #{tpu_custom_call.1} parent=39 // pred_fallthru
                _
              // Predicated region
              $region63: #{tpu_custom_call.1} parent=39 // pred_check
                _
              $region64: #{tpu_custom_call.1} parent=39 // pred_check_branch
                %252 = sbr.rel target = $region66
              $region65: #{tpu_custom_call.1} parent=39 // pred_region
                _
              $region66: #{tpu_custom_call.1} parent=39 // pred_fallthru
                _
            $region40: #{tpu_custom_call.1} parent=35 // pred_fallthru
              _
            // Predicated region
            $region41: #{tpu_custom_call.1} parent=35 // pred_check
              _
            $region42: #{tpu_custom_call.1} parent=35 // pred_check_branch
              %199 = sbr.rel target = $region44
            $region43: #{tpu_custom_call.1} parent=35 // pred_region
              loop: start=0, step=1, limit=1
              $region45: #{tpu_custom_call.1} parent=43 // loop_pre_header
                _
              $region46: #{tpu_custom_call.1} parent=43 // loop_header
                %s202 = sphi 0, %s206
                %p203 = scmp.ge.s32.totalorder %s202, 1
                %s207 = sphi %s193, %s193
                %s208 = sphi %s189, %s189
              $region47: #{tpu_custom_call.1} parent=43 // loop_header_branch
                %205 = sbr.rel (%p203) target = $region51
              $region48: #{tpu_custom_call.1} parent=43 // loop_body
                %v209 = vld [vmem:[%s207] sm:$0xff]
                %210 = vst [vmem:[%s208] sm:$0xff] %v209
                %v211 = vld [vmem:[%s207 + $0x10] sm:$0xff]
                %212 = vst [vmem:[%s208 + $0x8] sm:$0xff] %v211
                %v213 = vld [vmem:[%s207 + $0x20] sm:$0xff]
                %214 = vst [vmem:[%s208 + $0x10] sm:$0xff] %v213
                %v215 = vld [vmem:[%s207 + $0x30] sm:$0xff]
                %216 = vst [vmem:[%s208 + $0x18] sm:$0xff] %v215
                %v217 = vld [vmem:[%s207 + $0x40] sm:$0xff]
                %218 = vst [vmem:[%s208 + $0x20] sm:$0xff] %v217
                %v219 = vld [vmem:[%s207 + $0x50] sm:$0xff]
                %220 = vst [vmem:[%s208 + $0x28] sm:$0xff] %v219
                %v221 = vld [vmem:[%s207 + $0x60] sm:$0xff]
                %222 = vst [vmem:[%s208 + $0x30] sm:$0xff] %v221
                %v223 = vld [vmem:[%s207 + $0x70] sm:$0xff]
                %224 = vst [vmem:[%s208 + $0x38] sm:$0xff] %v223
              $region49: #{tpu_custom_call.1} parent=43 // loop_footer
                %s206 = sadd.s32 1, %s202
              $region50: #{tpu_custom_call.1} parent=43 // loop_footer_branch
                %201 = sbr.rel target = $region46
              $region51: #{tpu_custom_call.1} parent=43 // loop_exit
                _
            $region44: #{tpu_custom_call.1} parent=35 // pred_fallthru
              _
          $region36: #{tpu_custom_call.1} parent=31 // pred_fallthru
            _
          %253 = vnop
        $region32: #{tpu_custom_call.1} parent=27 // pred_fallthru
          _
        // Predicated region
        $region67: #{tpu_custom_call.1} parent=27 // pred_check
          %p254 = pneg %p60
        $region68: #{tpu_custom_call.1} parent=27 // pred_check_branch
          %256 = sbr.rel (%p254) target = $region70
        $region69: #{tpu_custom_call.1} parent=27 // pred_region
          %s257 = sand.u32 %s50, 1
          %s258 = sand.u32 %s50, 1
          %s259 = smul.addr %s258, 64
          %s260 = scalar_lea.vmem [#allocation3], %s259
          %s261 = smul.u32 8, %s14
          %s262 = smul.addr %s261, 2
          %s263 = sadd.s32 1, %s262
          %s264 = smul.addr %s263, 8
          %s265 = scalar_lea.vmem %s1, %s264
          // Predicated region
          $region71: #{tpu_custom_call.1} parent=69 // pred_check
            _
          $region72: #{tpu_custom_call.1} parent=69 // pred_check_branch
            %267 = sbr.rel (0) target = $region74
          $region73: #{tpu_custom_call.1} parent=69 // pred_region
            // Predicated region
            $region75: #{tpu_custom_call.1} parent=73 // pred_check
              _
            $region76: #{tpu_custom_call.1} parent=73 // pred_check_branch
              %269 = sbr.rel (0) target = $region78
            $region77: #{tpu_custom_call.1} parent=73 // pred_region
              // Predicated region
              $region90: #{tpu_custom_call.1} parent=77 // pred_check
                _
              $region91: #{tpu_custom_call.1} parent=77 // pred_check_branch
                %298 = sbr.rel (0) target = $region93
              $region92: #{tpu_custom_call.1} parent=77 // pred_region
                loop: start=0, step=1, limit=1
                $region94: #{tpu_custom_call.1} parent=92 // loop_pre_header
                  _
                $region95: #{tpu_custom_call.1} parent=92 // loop_header
                  %s300 = sphi 0, %s304
                  %p301 = scmp.ge.s32.totalorder %s300, 1
                  %s305 = sphi %s265, %s265
                  %s306 = sphi %s260, %s260
                $region96: #{tpu_custom_call.1} parent=92 // loop_header_branch
                  %303 = sbr.rel (%p301) target = $region100
                $region97: #{tpu_custom_call.1} parent=92 // loop_body
                  %v307 = vld [vmem:[%s305] sm:$0xff]
                  %308 = vst [vmem:[%s306] sm:$0xff] %v307
                  %v309 = vld [vmem:[%s305 + $0x10] sm:$0xff]
                  %310 = vst [vmem:[%s306 + $0x8] sm:$0xff] %v309
                  %v311 = vld [vmem:[%s305 + $0x20] sm:$0xff]
                  %312 = vst [vmem:[%s306 + $0x10] sm:$0xff] %v311
                  %v313 = vld [vmem:[%s305 + $0x30] sm:$0xff]
                  %314 = vst [vmem:[%s306 + $0x18] sm:$0xff] %v313
                  %v315 = vld [vmem:[%s305 + $0x40] sm:$0xff]
                  %316 = vst [vmem:[%s306 + $0x20] sm:$0xff] %v315
                  %v317 = vld [vmem:[%s305 + $0x50] sm:$0xff]
                  %318 = vst [vmem:[%s306 + $0x28] sm:$0xff] %v317
                  %v319 = vld [vmem:[%s305 + $0x60] sm:$0xff]
                  %320 = vst [vmem:[%s306 + $0x30] sm:$0xff] %v319
                  %v321 = vld [vmem:[%s305 + $0x70] sm:$0xff]
                  %322 = vst [vmem:[%s306 + $0x38] sm:$0xff] %v321
                $region98: #{tpu_custom_call.1} parent=92 // loop_footer
                  %s304 = sadd.s32 1, %s300
                $region99: #{tpu_custom_call.1} parent=92 // loop_footer_branch
                  %299 = sbr.rel target = $region95
                $region100: #{tpu_custom_call.1} parent=92 // loop_exit
                  _
              $region93: #{tpu_custom_call.1} parent=77 // pred_fallthru
                _
              // Predicated region
              $region101: #{tpu_custom_call.1} parent=77 // pred_check
                _
              $region102: #{tpu_custom_call.1} parent=77 // pred_check_branch
                %324 = sbr.rel target = $region104
              $region103: #{tpu_custom_call.1} parent=77 // pred_region
                _
              $region104: #{tpu_custom_call.1} parent=77 // pred_fallthru
                _
            $region78: #{tpu_custom_call.1} parent=73 // pred_fallthru
              _
            // Predicated region
            $region79: #{tpu_custom_call.1} parent=73 // pred_check
              _
            $region80: #{tpu_custom_call.1} parent=73 // pred_check_branch
              %271 = sbr.rel target = $region82
            $region81: #{tpu_custom_call.1} parent=73 // pred_region
              loop: start=0, step=1, limit=1
              $region83: #{tpu_custom_call.1} parent=81 // loop_pre_header
                _
              $region84: #{tpu_custom_call.1} parent=81 // loop_header
                %s274 = sphi 0, %s278
                %p275 = scmp.ge.s32.totalorder %s274, 1
                %s279 = sphi %s265, %s265
                %s280 = sphi %s260, %s260
              $region85: #{tpu_custom_call.1} parent=81 // loop_header_branch
                %277 = sbr.rel (%p275) target = $region89
              $region86: #{tpu_custom_call.1} parent=81 // loop_body
                %v281 = vld [vmem:[%s279] sm:$0xff]
                %282 = vst [vmem:[%s280] sm:$0xff] %v281
                %v283 = vld [vmem:[%s279 + $0x10] sm:$0xff]
                %284 = vst [vmem:[%s280 + $0x8] sm:$0xff] %v283
                %v285 = vld [vmem:[%s279 + $0x20] sm:$0xff]
                %286 = vst [vmem:[%s280 + $0x10] sm:$0xff] %v285
                %v287 = vld [vmem:[%s279 + $0x30] sm:$0xff]
                %288 = vst [vmem:[%s280 + $0x18] sm:$0xff] %v287
                %v289 = vld [vmem:[%s279 + $0x40] sm:$0xff]
                %290 = vst [vmem:[%s280 + $0x20] sm:$0xff] %v289
                %v291 = vld [vmem:[%s279 + $0x50] sm:$0xff]
                %292 = vst [vmem:[%s280 + $0x28] sm:$0xff] %v291
                %v293 = vld [vmem:[%s279 + $0x60] sm:$0xff]
                %294 = vst [vmem:[%s280 + $0x30] sm:$0xff] %v293
                %v295 = vld [vmem:[%s279 + $0x70] sm:$0xff]
                %296 = vst [vmem:[%s280 + $0x38] sm:$0xff] %v295
              $region87: #{tpu_custom_call.1} parent=81 // loop_footer
                %s278 = sadd.s32 1, %s274
              $region88: #{tpu_custom_call.1} parent=81 // loop_footer_branch
                %273 = sbr.rel target = $region84
              $region89: #{tpu_custom_call.1} parent=81 // loop_exit
                _
            $region82: #{tpu_custom_call.1} parent=73 // pred_fallthru
              _
          $region74: #{tpu_custom_call.1} parent=69 // pred_fallthru
            _
          %325 = vnop
        $region70: #{tpu_custom_call.1} parent=27 // pred_fallthru
          _
      $region28: #{tpu_custom_call.1} parent=5 // pred_fallthru
        _
      %p326 = scmp.le.s32.totalorder 1, %s14
      %p327 = scmp.lt.s32.totalorder %s14, 3
      %p328 = pnand %p326, %p327
      %p329 = pneg %p328
      // Predicated region
      $region105: #{tpu_custom_call.1} parent=5 // pred_check
        _
      $region106: #{tpu_custom_call.1} parent=5 // pred_check_branch
        %331 = sbr.rel (%p328) target = $region108
      $region107: #{tpu_custom_call.1} parent=5 // pred_region
        %s332 = ssub.s32 %s14, 1
        %s333 = sand.u32 %s27, 1
        %s334 = sand.u32 %s27, 1
        %s335 = smul.addr %s334, 64
        %s336 = scalar_lea.vmem [#allocation2], %s335
        // Predicated region
        $region109: #{tpu_custom_call.1} parent=107 // pred_check
          %p337 = pneg %p40
        $region110: #{tpu_custom_call.1} parent=107 // pred_check_branch
          %339 = sbr.rel (%p337) target = $region112
        $region111: #{tpu_custom_call.1} parent=107 // pred_region
          _
        $region112: #{tpu_custom_call.1} parent=107 // pred_fallthru
          _
        %s340 = sand.u32 %s53, 1
        %s341 = sand.u32 %s53, 1
        %s342 = smul.addr %s341, 64
        %s343 = scalar_lea.vmem [#allocation3], %s342
        // Predicated region
        $region113: #{tpu_custom_call.1} parent=107 // pred_check
          %p344 = pneg %p66
        $region114: #{tpu_custom_call.1} parent=107 // pred_check_branch
          %346 = sbr.rel (%p344) target = $region116
        $region115: #{tpu_custom_call.1} parent=107 // pred_region
          _
        $region116: #{tpu_custom_call.1} parent=107 // pred_fallthru
          _
        %s347 = sand.u32 %s27, 1
        %s348 = sand.u32 %s27, 1
        %s349 = smul.addr %s348, 64
        %s350 = scalar_lea.vmem [#allocation2], %s349
        %p351 = pneg %p40
        %p352 = pneg %p37
        %s353 = sand.u32 %s53, 1
        %s354 = sand.u32 %s53, 1
        %s355 = smul.addr %s354, 64
        %s356 = scalar_lea.vmem [#allocation3], %s355
        %p357 = pneg %p66
        %p358 = pneg %p63
        %p359 = pneg %p87
        %p360 = pneg %p84
        %p361 = pneg %p108
        %p362 = pneg %p105
        %p363 = pneg %p129
        %p364 = pneg %p126
        %p365 = pneg %p155
        %p366 = pneg %p152
        %s367 = sand.u32 %s142, 1
        %s368 = scalar_lea.sflag [#allocation5], %s367
        %s369 = sand.u32 %s142, 1
        %s370 = smul.addr %s369, 64
        %s371 = scalar_lea.vmem [#allocation4], %s370
        %s372 = smul.u32 8, %s19
        %s373 = smul.u32 8, %s19
        %s374 = smul.u32 8, %s19
        %v375 = vld [vmem:[%s336] sm:$0xff]
        %v376 = vld [vmem:[%s336 + $0x8] sm:$0xff]
        %v377 = vld [vmem:[%s336 + $0x10] sm:$0xff]
        %v378 = vld [vmem:[%s336 + $0x18] sm:$0xff]
        %v379 = vld [vmem:[%s336 + $0x20] sm:$0xff]
        %v380 = vld [vmem:[%s336 + $0x28] sm:$0xff]
        %v381 = vld [vmem:[%s336 + $0x30] sm:$0xff]
        %v382 = vld [vmem:[%s336 + $0x38] sm:$0xff]
        %v383 = vld [vmem:[%s343] sm:$0xff]
        %v384 = vld [vmem:[%s343 + $0x8] sm:$0xff]
        %v385 = vld [vmem:[%s343 + $0x10] sm:$0xff]
        %v386 = vld [vmem:[%s343 + $0x18] sm:$0xff]
        %v387 = vld [vmem:[%s343 + $0x20] sm:$0xff]
        %v388 = vld [vmem:[%s343 + $0x28] sm:$0xff]
        %v389 = vld [vmem:[%s343 + $0x30] sm:$0xff]
        %v390 = vld [vmem:[%s343 + $0x38] sm:$0xff]
        %vm391 = vcmask 64512
        %v392 = vsel %vm391, %v375, 0.0
        %393 = vadd.xlane.f32.xlu0 %v392
        %v394 = vpop.xlane.xlu0 %393
        %v395 = vsel %vm391, %v376, 0.0
        %396 = vadd.xlane.f32.xlu0 %v395
        %v397 = vpop.xlane.xlu0 %396
        %v398 = vsel %vm391, %v377, 0.0
        %399 = vadd.xlane.f32.xlu0 %v398
        %v400 = vpop.xlane.xlu0 %399
        %v401 = vsel %vm391, %v378, 0.0
        %402 = vadd.xlane.f32.xlu0 %v401
        %v403 = vpop.xlane.xlu0 %402
        %v404 = vsel %vm391, %v379, 0.0
        %405 = vadd.xlane.f32.xlu0 %v404
        %v406 = vpop.xlane.xlu0 %405
        %v407 = vsel %vm391, %v380, 0.0
        %408 = vadd.xlane.f32.xlu0 %v407
        %v409 = vpop.xlane.xlu0 %408
        %v410 = vsel %vm391, %v381, 0.0
        %411 = vadd.xlane.f32.xlu0 %v410
        %v412 = vpop.xlane.xlu0 %411
        %v413 = vsel %vm391, %v382, 0.0
        %414 = vadd.xlane.f32.xlu0 %v413
        %v415 = vpop.xlane.xlu0 %414
        %v416 = vsel %vm391, %v383, 0.0
        %417 = vadd.xlane.f32.xlu0 %v416
        %v418 = vpop.xlane.xlu0 %417
        %v419 = vsel %vm391, %v384, 0.0
        %420 = vadd.xlane.f32.xlu0 %v419
        %v421 = vpop.xlane.xlu0 %420
        %v422 = vsel %vm391, %v385, 0.0
        %423 = vadd.xlane.f32.xlu0 %v422
        %v424 = vpop.xlane.xlu0 %423
        %v425 = vsel %vm391, %v386, 0.0
        %426 = vadd.xlane.f32.xlu0 %v425
        %v427 = vpop.xlane.xlu0 %426
        %v428 = vsel %vm391, %v387, 0.0
        %429 = vadd.xlane.f32.xlu0 %v428
        %v430 = vpop.xlane.xlu0 %429
        %v431 = vsel %vm391, %v388, 0.0
        %432 = vadd.xlane.f32.xlu0 %v431
        %v433 = vpop.xlane.xlu0 %432
        %v434 = vsel %vm391, %v389, 0.0
        %435 = vadd.xlane.f32.xlu0 %v434
        %v436 = vpop.xlane.xlu0 %435
        %v437 = vsel %vm391, %v390, 0.0
        %438 = vadd.xlane.f32.xlu0 %v437
        %v439 = vpop.xlane.xlu0 %438
        %v440 = vadd.f32 %v394, %v418
        %v441 = vadd.f32 %v397, %v421
        %v442 = vadd.f32 %v400, %v424
        %v443 = vadd.f32 %v403, %v427
        %v444 = vadd.f32 %v406, %v430
        %v445 = vadd.f32 %v409, %v433
        %v446 = vadd.f32 %v412, %v436
        %v447 = vadd.f32 %v415, %v439
        %v448 = vmul.f32 %v375, %v375
        %v449 = vmul.f32 %v376, %v376
        %v450 = vmul.f32 %v377, %v377
        %v451 = vmul.f32 %v378, %v378
        %v452 = vmul.f32 %v379, %v379
        %v453 = vmul.f32 %v380, %v380
        %v454 = vmul.f32 %v381, %v381
        %v455 = vmul.f32 %v382, %v382
        %v456 = vsel %vm391, %v448, 0.0
        %457 = vadd.xlane.f32.xlu0 %v456
        %v458 = vpop.xlane.xlu0 %457
        %v459 = vsel %vm391, %v449, 0.0
        %460 = vadd.xlane.f32.xlu0 %v459
        %v461 = vpop.xlane.xlu0 %460
        %v462 = vsel %vm391, %v450, 0.0
        %463 = vadd.xlane.f32.xlu0 %v462
        %v464 = vpop.xlane.xlu0 %463
        %v465 = vsel %vm391, %v451, 0.0
        %466 = vadd.xlane.f32.xlu0 %v465
        %v467 = vpop.xlane.xlu0 %466
        %v468 = vsel %vm391, %v452, 0.0
        %469 = vadd.xlane.f32.xlu0 %v468
        %v470 = vpop.xlane.xlu0 %469
        %v471 = vsel %vm391, %v453, 0.0
        %472 = vadd.xlane.f32.xlu0 %v471
        %v473 = vpop.xlane.xlu0 %472
        %v474 = vsel %vm391, %v454, 0.0
        %475 = vadd.xlane.f32.xlu0 %v474
        %v476 = vpop.xlane.xlu0 %475
        %v477 = vsel %vm391, %v455, 0.0
        %478 = vadd.xlane.f32.xlu0 %v477
        %v479 = vpop.xlane.xlu0 %478
        %v480 = vmul.f32 %v383, %v383
        %v481 = vmul.f32 %v384, %v384
        %v482 = vmul.f32 %v385, %v385
        %v483 = vmul.f32 %v386, %v386
        %v484 = vmul.f32 %v387, %v387
        %v485 = vmul.f32 %v388, %v388
        %v486 = vmul.f32 %v389, %v389
        %v487 = vmul.f32 %v390, %v390
        %v488 = vsel %vm391, %v480, 0.0
        %489 = vadd.xlane.f32.xlu0 %v488
        %v490 = vpop.xlane.xlu0 %489
        %v491 = vsel %vm391, %v481, 0.0
        %492 = vadd.xlane.f32.xlu0 %v491
        %v493 = vpop.xlane.xlu0 %492
        %v494 = vsel %vm391, %v482, 0.0
        %495 = vadd.xlane.f32.xlu0 %v494
        %v496 = vpop.xlane.xlu0 %495
        %v497 = vsel %vm391, %v483, 0.0
        %498 = vadd.xlane.f32.xlu0 %v497
        %v499 = vpop.xlane.xlu0 %498
        %v500 = vsel %vm391, %v484, 0.0
        %501 = vadd.xlane.f32.xlu0 %v500
        %v502 = vpop.xlane.xlu0 %501
        %v503 = vsel %vm391, %v485, 0.0
        %504 = vadd.xlane.f32.xlu0 %v503
        %v505 = vpop.xlane.xlu0 %504
        %v506 = vsel %vm391, %v486, 0.0
        %507 = vadd.xlane.f32.xlu0 %v506
        %v508 = vpop.xlane.xlu0 %507
        %v509 = vsel %vm391, %v487, 0.0
        %510 = vadd.xlane.f32.xlu0 %v509
        %v511 = vpop.xlane.xlu0 %510
        %v512 = vadd.f32 %v458, %v490
        %v513 = vadd.f32 %v461, %v493
        %v514 = vadd.f32 %v464, %v496
        %v515 = vadd.f32 %v467, %v499
        %v516 = vadd.f32 %v470, %v502
        %v517 = vadd.f32 %v473, %v505
        %v518 = vadd.f32 %v476, %v508
        %v519 = vadd.f32 %v479, %v511
        %v520 = vmul.f32 %v440, 0.0625
        %v521 = vmul.f32 %v441, 0.0625
        %v522 = vmul.f32 %v442, 0.0625
        %v523 = vmul.f32 %v443, 0.0625
        %v524 = vmul.f32 %v444, 0.0625
        %v525 = vmul.f32 %v445, 0.0625
        %v526 = vmul.f32 %v446, 0.0625
        %v527 = vmul.f32 %v447, 0.0625
        %v528 = vmul.f32 %v512, 0.0625
        %v529 = vmul.f32 %v513, 0.0625
        %v530 = vmul.f32 %v514, 0.0625
        %v531 = vmul.f32 %v515, 0.0625
        %v532 = vmul.f32 %v516, 0.0625
        %v533 = vmul.f32 %v517, 0.0625
        %v534 = vmul.f32 %v518, 0.0625
        %v535 = vmul.f32 %v519, 0.0625
        %v536 = vmul.f32 %v520, %v520
        %v537 = vmul.f32 %v521, %v521
        %v538 = vmul.f32 %v522, %v522
        %v539 = vmul.f32 %v523, %v523
        %v540 = vmul.f32 %v524, %v524
        %v541 = vmul.f32 %v525, %v525
        %v542 = vmul.f32 %v526, %v526
        %v543 = vmul.f32 %v527, %v527
        %v544 = vsub.f32 %v528, %v536
        %v545 = vsub.f32 %v529, %v537
        %v546 = vsub.f32 %v530, %v538
        %v547 = vsub.f32 %v531, %v539
        %v548 = vsub.f32 %v532, %v540
        %v549 = vsub.f32 %v533, %v541
        %v550 = vsub.f32 %v534, %v542
        %v551 = vsub.f32 %v535, %v543
        %v552 = vadd.f32 %v544, 1e-05
        %v553 = vadd.f32 %v545, 1e-05
        %v554 = vadd.f32 %v546, 1e-05
        %v555 = vadd.f32 %v547, 1e-05
        %v556 = vadd.f32 %v548, 1e-05
        %v557 = vadd.f32 %v549, 1e-05
        %v558 = vadd.f32 %v550, 1e-05
        %v559 = vadd.f32 %v551, 1e-05
        %v560 = vrsqrt.pop %v552
        %v561 = vrsqrt.pop %v553
        %v562 = vrsqrt.pop %v554
        %v563 = vrsqrt.pop %v555
        %v564 = vrsqrt.pop %v556
        %v565 = vrsqrt.pop %v557
        %v566 = vrsqrt.pop %v558
        %v567 = vrsqrt.pop %v559
        %v568 = vsub.f32 %v375, %v520
        %v569 = vsub.f32 %v376, %v521
        %v570 = vsub.f32 %v377, %v522
        %v571 = vsub.f32 %v378, %v523
        %v572 = vsub.f32 %v379, %v524
        %v573 = vsub.f32 %v380, %v525
        %v574 = vsub.f32 %v381, %v526
        %v575 = vsub.f32 %v382, %v527
        %v576 = vmul.f32 %v568, %v560
        %v577 = vmul.f32 %v569, %v561
        %v578 = vmul.f32 %v570, %v562
        %v579 = vmul.f32 %v571, %v563
        %v580 = vmul.f32 %v572, %v564
        %v581 = vmul.f32 %v573, %v565
        %v582 = vmul.f32 %v574, %v566
        %v583 = vmul.f32 %v575, %v567
        %v584 = vsub.f32 %v383, %v520
        %v585 = vsub.f32 %v384, %v521
        %v586 = vsub.f32 %v385, %v522
        %v587 = vsub.f32 %v386, %v523
        %v588 = vsub.f32 %v387, %v524
        %v589 = vsub.f32 %v388, %v525
        %v590 = vsub.f32 %v389, %v526
        %v591 = vsub.f32 %v390, %v527
        %v592 = vmul.f32 %v584, %v560
        %v593 = vmul.f32 %v585, %v561
        %v594 = vmul.f32 %v586, %v562
        %v595 = vmul.f32 %v587, %v563
        %v596 = vmul.f32 %v588, %v564
        %v597 = vmul.f32 %v589, %v565
        %v598 = vmul.f32 %v590, %v566
        %v599 = vmul.f32 %v591, %v567
        %v600 = vld [vmem:[%s2] sm:$0xff]
        %v601 = vld [vmem:[%s3] sm:$0xff]
        %v603 = vsel %vm391, %v592, 0
        %v606 = vsel %vm391, %v593, 0
        %v609 = vsel %vm391, %v594, 0
        %v612 = vsel %vm391, %v595, 0
        %v615 = vsel %vm391, %v596, 0
        %v618 = vsel %vm391, %v597, 0
        %v621 = vsel %vm391, %v598, 0
        %v624 = vsel %vm391, %v599, 0
        %626 = vmatprep.subr.mxu0 0.0
        %627 = vmatpush1.msra.mxu0 %v601
        %628 = vmatprep.subr.mxu0 0.0
        %629 = vmatpush1.msra.mxu0 0.0
        %630 = vmatprep.subr.mxu0 0.0
        %631 = vmatpush1.msra.mxu0 0.0
        %632 = vmatprep.subr.mxu0 0.0
        %633 = vmatpush1.msra.mxu0 0.0
        %634 = vmatprep.subr.mxu0 0.0
        %635 = vmatpush1.msra.mxu0 0.0
        %636 = vmatprep.subr.mxu0 0.0
        %637 = vmatpush1.msra.mxu0 0.0
        %638 = vmatprep.subr.mxu0 0.0
        %639 = vmatpush1.msra.mxu0 0.0
        %640 = vmatprep.subr.mxu0 0.0
        %641 = vmatpush1.msra.mxu0 0.0
        %642 = vmatprep.subr.mxu0 0.0
        %643 = vmatpush1.msra.mxu0 0.0
        %644 = vmatprep.subr.mxu0 0.0
        %645 = vmatpush1.msra.mxu0 0.0
        %646 = vmatprep.subr.mxu0 0.0
        %647 = vmatpush1.msra.mxu0 0.0
        %648 = vmatprep.subr.mxu0 0.0
        %649 = vmatpush1.msra.mxu0 0.0
        %650 = vmatprep.subr.mxu0 0.0
        %651 = vmatpush1.msra.mxu0 0.0
        %652 = vmatprep.subr.mxu0 0.0
        %653 = vmatpush1.msra.mxu0 0.0
        %654 = vmatprep.subr.mxu0 0.0
        %655 = vmatpush1.msra.mxu0 0.0
        %656 = vmatprep.subr.mxu0 0.0
        %657 = vmatpush1.msra.mxu0 0.0
        %658 = vmatprep.subr.mxu0 0.0
        %659 = vmatpush1.msra.mxu0 0.0
        %660 = vmatprep.subr.mxu0 0.0
        %661 = vmatpush1.msra.mxu0 0.0
        %662 = vmatprep.subr.mxu0 0.0
        %663 = vmatpush1.msra.mxu0 0.0
        %664 = vmatprep.subr.mxu0 0.0
        %665 = vmatpush1.msra.mxu0 0.0
        %666 = vmatprep.subr.mxu0 0.0
        %667 = vmatpush1.msra.mxu0 0.0
        %668 = vmatprep.subr.mxu0 0.0
        %669 = vmatpush1.msra.mxu0 0.0
        %670 = vmatprep.subr.mxu0 0.0
        %671 = vmatpush1.msra.mxu0 0.0
        %672 = vmatprep.subr.mxu0 0.0
        %673 = vmatpush1.msra.mxu0 0.0
        %674 = vmatprep.subr.mxu0 0.0
        %675 = vmatpush1.msra.mxu0 0.0
        %676 = vmatprep.subr.mxu0 0.0
        %677 = vmatpush1.msra.mxu0 0.0
        %678 = vmatprep.subr.mxu0 0.0
        %679 = vmatpush1.msra.mxu0 0.0
        %680 = vmatprep.subr.mxu0 0.0
        %681 = vmatpush1.msra.mxu0 0.0
        %682 = vmatprep.subr.mxu0 0.0
        %683 = vmatpush1.msra.mxu0 0.0
        %684 = vmatprep.subr.mxu0 0.0
        %685 = vmatpush1.msra.mxu0 0.0
        %686 = vmatprep.subr.mxu0 0.0
        %687 = vmatpush1.msra.mxu0 0.0
        %688 = vmatprep.subr.mxu0 0.0
        %689 = vmatpush1.msra.mxu0 0.0
        %690 = vmatprep.mubr.f32.mxu0 0.0
        %691 = vmatmul.mubr.f32.gmra.mrb[0].mxu0 %v603
        %v692 = vpop.f32.mrb[0].mxu0
        %v693 = vadd.f32 0.0, %v692
        %v694 = vpop.f32.mrb[0].mxu0
        %695 = vmatprep.mubr.f32.mxu0 0.0
        %696 = vmatmul.mubr.f32.gmra.mrb[0].mxu0 %v606
        %v697 = vpop.f32.mrb[0].mxu0
        %v698 = vadd.f32 0.0, %v697
        %v699 = vpop.f32.mrb[0].mxu0
        %700 = vmatprep.mubr.f32.mxu0 0.0
        %701 = vmatmul.mubr.f32.gmra.mrb[0].mxu0 %v609
        %v702 = vpop.f32.mrb[0].mxu0
        %v703 = vadd.f32 0.0, %v702
        %v704 = vpop.f32.mrb[0].mxu0
        %705 = vmatprep.mubr.f32.mxu0 0.0
        %706 = vmatmul.mubr.f32.gmra.mrb[0].mxu0 %v612
        %v707 = vpop.f32.mrb[0].mxu0
        %v708 = vadd.f32 0.0, %v707
        %v709 = vpop.f32.mrb[0].mxu0
        %710 = vmatprep.mubr.f32.mxu0 0.0
        %711 = vmatmul.mubr.f32.gmra.mrb[0].mxu0 %v615
        %v712 = vpop.f32.mrb[0].mxu0
        %v713 = vadd.f32 0.0, %v712
        %v714 = vpop.f32.mrb[0].mxu0
        %715 = vmatprep.mubr.f32.mxu0 0.0
        %716 = vmatmul.mubr.f32.gmra.mrb[0].mxu0 %v618
        %v717 = vpop.f32.mrb[0].mxu0
        %v718 = vadd.f32 0.0, %v717
        %v719 = vpop.f32.mrb[0].mxu0
        %720 = vmatprep.mubr.f32.mxu0 0.0
        %721 = vmatmul.mubr.f32.gmra.mrb[0].mxu0 %v621
        %v722 = vpop.f32.mrb[0].mxu0
        %v723 = vadd.f32 0.0, %v722
        %v724 = vpop.f32.mrb[0].mxu0
        %725 = vmatprep.mubr.f32.mxu0 0.0
        %726 = vmatmul.mubr.f32.gmra.mrb[0].mxu0 %v624
        %v727 = vpop.f32.mrb[0].mxu0
        %v728 = vadd.f32 0.0, %v727
        %v729 = vpop.f32.mrb[0].mxu0
        %730 = vdwg.mxu0
        %v732 = vsel %vm391, %v576, 0
        %v735 = vsel %vm391, %v577, 0
        %v738 = vsel %vm391, %v578, 0
        %v741 = vsel %vm391, %v579, 0
        %v744 = vsel %vm391, %v580, 0
        %v747 = vsel %vm391, %v581, 0
        %v750 = vsel %vm391, %v582, 0
        %v753 = vsel %vm391, %v583, 0
        %755 = vmatprep.subr.mxu0 0.0
        %756 = vmatpush1.msra.mxu0 %v600
        %757 = vmatprep.subr.mxu0 0.0
        %758 = vmatpush1.msra.mxu0 0.0
        %759 = vmatprep.subr.mxu0 0.0
        %760 = vmatpush1.msra.mxu0 0.0
        %761 = vmatprep.subr.mxu0 0.0
        %762 = vmatpush1.msra.mxu0 0.0
        %763 = vmatprep.subr.mxu0 0.0
        %764 = vmatpush1.msra.mxu0 0.0
        %765 = vmatprep.subr.mxu0 0.0
        %766 = vmatpush1.msra.mxu0 0.0
        %767 = vmatprep.subr.mxu0 0.0
        %768 = vmatpush1.msra.mxu0 0.0
        %769 = vmatprep.subr.mxu0 0.0
        %770 = vmatpush1.msra.mxu0 0.0
        %771 = vmatprep.subr.mxu0 0.0
        %772 = vmatpush1.msra.mxu0 0.0
        %773 = vmatprep.subr.mxu0 0.0
        %774 = vmatpush1.msra.mxu0 0.0
        %775 = vmatprep.subr.mxu0 0.0
        %776 = vmatpush1.msra.mxu0 0.0
        %777 = vmatprep.subr.mxu0 0.0
        %778 = vmatpush1.msra.mxu0 0.0
        %779 = vmatprep.subr.mxu0 0.0
        %780 = vmatpush1.msra.mxu0 0.0
        %781 = vmatprep.subr.mxu0 0.0
        %782 = vmatpush1.msra.mxu0 0.0
        %783 = vmatprep.subr.mxu0 0.0
        %784 = vmatpush1.msra.mxu0 0.0
        %785 = vmatprep.subr.mxu0 0.0
        %786 = vmatpush1.msra.mxu0 0.0
        %787 = vmatprep.subr.mxu0 0.0
        %788 = vmatpush1.msra.mxu0 0.0
        %789 = vmatprep.subr.mxu0 0.0
        %790 = vmatpush1.msra.mxu0 0.0
        %791 = vmatprep.subr.mxu0 0.0
        %792 = vmatpush1.msra.mxu0 0.0
        %793 = vmatprep.subr.mxu0 0.0
        %794 = vmatpush1.msra.mxu0 0.0
        %795 = vmatprep.subr.mxu0 0.0
        %796 = vmatpush1.msra.mxu0 0.0
        %797 = vmatprep.subr.mxu0 0.0
        %798 = vmatpush1.msra.mxu0 0.0
        %799 = vmatprep.subr.mxu0 0.0
        %800 = vmatpush1.msra.mxu0 0.0
        %801 = vmatprep.subr.mxu0 0.0
        %802 = vmatpush1.msra.mxu0 0.0
        %803 = vmatprep.subr.mxu0 0.0
        %804 = vmatpush1.msra.mxu0 0.0
        %805 = vmatprep.subr.mxu0 0.0
        %806 = vmatpush1.msra.mxu0 0.0
        %807 = vmatprep.subr.mxu0 0.0
        %808 = vmatpush1.msra.mxu0 0.0
        %809 = vmatprep.subr.mxu0 0.0
        %810 = vmatpush1.msra.mxu0 0.0
        %811 = vmatprep.subr.mxu0 0.0
        %812 = vmatpush1.msra.mxu0 0.0
        %813 = vmatprep.subr.mxu0 0.0
        %814 = vmatpush1.msra.mxu0 0.0
        %815 = vmatprep.subr.mxu0 0.0
        %816 = vmatpush1.msra.mxu0 0.0
        %817 = vmatprep.subr.mxu0 0.0
        %818 = vmatpush1.msra.mxu0 0.0
        %819 = vmatprep.mubr.f32.mxu0 0.0
        %820 = vmatmul.mubr.f32.gmra.mrb[0].mxu0 %v732
        %v821 = vpop.f32.mrb[0].mxu0
        %v822 = vadd.f32 %v693, %v821
        %v823 = vpop.f32.mrb[0].mxu0
        %824 = vmatprep.mubr.f32.mxu0 0.0
        %825 = vmatmul.mubr.f32.gmra.mrb[0].mxu0 %v735
        %v826 = vpop.f32.mrb[0].mxu0
        %v827 = vadd.f32 %v698, %v826
        %v828 = vpop.f32.mrb[0].mxu0
        %829 = vmatprep.mubr.f32.mxu0 0.0
        %830 = vmatmul.mubr.f32.gmra.mrb[0].mxu0 %v738
        %v831 = vpop.f32.mrb[0].mxu0
        %v832 = vadd.f32 %v703, %v831
        %v833 = vpop.f32.mrb[0].mxu0
        %834 = vmatprep.mubr.f32.mxu0 0.0
        %835 = vmatmul.mubr.f32.gmra.mrb[0].mxu0 %v741
        %v836 = vpop.f32.mrb[0].mxu0
        %v837 = vadd.f32 %v708, %v836
        %v838 = vpop.f32.mrb[0].mxu0
        %839 = vmatprep.mubr.f32.mxu0 0.0
        %840 = vmatmul.mubr.f32.gmra.mrb[0].mxu0 %v744
        %v841 = vpop.f32.mrb[0].mxu0
        %v842 = vadd.f32 %v713, %v841
        %v843 = vpop.f32.mrb[0].mxu0
        %844 = vmatprep.mubr.f32.mxu0 0.0
        %845 = vmatmul.mubr.f32.gmra.mrb[0].mxu0 %v747
        %v846 = vpop.f32.mrb[0].mxu0
        %v847 = vadd.f32 %v718, %v846
        %v848 = vpop.f32.mrb[0].mxu0
        %849 = vmatprep.mubr.f32.mxu0 0.0
        %850 = vmatmul.mubr.f32.gmra.mrb[0].mxu0 %v750
        %v851 = vpop.f32.mrb[0].mxu0
        %v852 = vadd.f32 %v723, %v851
        %v853 = vpop.f32.mrb[0].mxu0
        %854 = vmatprep.mubr.f32.mxu0 0.0
        %855 = vmatmul.mubr.f32.gmra.mrb[0].mxu0 %v753
        %v856 = vpop.f32.mrb[0].mxu0
        %v857 = vadd.f32 %v728, %v856
        %v858 = vpop.f32.mrb[0].mxu0
        %859 = vdwg.mxu0
        %v860 = vld [vmem:[%s4] sm:$0x1]
        %v862 = vlaneseq
        %v863 = vshrl.u32 %v862, 7
        %v864 = vsub.s32 0, %v863
        %v865 = vrot.slane %v860, %v864
        %v867 = vadd.f32 %v822, %v865
        %v868 = vadd.f32 %v827, %v865
        %v869 = vadd.f32 %v832, %v865
        %v870 = vadd.f32 %v837, %v865
        %v871 = vadd.f32 %v842, %v865
        %v872 = vadd.f32 %v847, %v865
        %v873 = vadd.f32 %v852, %v865
        %v874 = vadd.f32 %v857, %v865
        %875 = vst [vmem:[%s371] sm:$0xff] %v867
        %876 = vst [vmem:[%s371 + $0x8] sm:$0xff] %v868
        %877 = vst [vmem:[%s371 + $0x10] sm:$0xff] %v869
        %878 = vst [vmem:[%s371 + $0x18] sm:$0xff] %v870
        %879 = vst [vmem:[%s371 + $0x20] sm:$0xff] %v871
        %880 = vst [vmem:[%s371 + $0x28] sm:$0xff] %v872
        %881 = vst [vmem:[%s371 + $0x30] sm:$0xff] %v873
        %882 = vst [vmem:[%s371 + $0x38] sm:$0xff] %v874
        %s883 = sand.u32 %s142, 1
        %s884 = scalar_lea.sflag [#allocation5], %s883
        %s885 = sand.u32 %s142, 1
        %s886 = smul.addr %s885, 64
        %s887 = scalar_lea.vmem [#allocation4], %s886
        // Predicated region
        $region117: #{tpu_custom_call.1} parent=107 // pred_check
          %p888 = pneg %p152
        $region118: #{tpu_custom_call.1} parent=107 // pred_check_branch
          %890 = sbr.rel (%p888) target = $region120
        $region119: #{tpu_custom_call.1} parent=107 // pred_region
          %s891 = smul.u32 8, %s19
          %s893 = ssub.s32 1024, 1024
          %894 = vsyncadd %s884, %s893
          %s895 = smul.addr %s891, 128
          %s896 = scalar_lea.hbm %s5, %s895
          %s897 = sshll.u32 %s887, 4
          %s898 = int_to_ptr.vmem [resolvable:$true] %s897
          %903 = dma.vmem_to_hbm [thread:$0]  %s898, 1024, %s896, %s884, 128, 128, 8
        $region120: #{tpu_custom_call.1} parent=107 // pred_fallthru
          _
      $region108: #{tpu_custom_call.1} parent=5 // pred_fallthru
        _
      %p904 = scmp.le.s32.totalorder 2, %s14
      // Predicated region
      $region121: #{tpu_custom_call.1} parent=5 // pred_check
        %p905 = pneg %p904
      $region122: #{tpu_custom_call.1} parent=5 // pred_check_branch
        %907 = sbr.rel (%p905) target = $region124
      $region123: #{tpu_custom_call.1} parent=5 // pred_region
        %s908 = ssub.s32 %s14, 2
        // Predicated region
        $region125: #{tpu_custom_call.1} parent=123 // pred_check
          %p909 = pneg %p158
        $region126: #{tpu_custom_call.1} parent=123 // pred_check_branch
          %911 = sbr.rel (%p909) target = $region128
        $region127: #{tpu_custom_call.1} parent=123 // pred_region
          %s912 = sand.u32 %s143, 1
          %s913 = scalar_lea.sflag [#allocation5], %s912
          %s914 = sand.u32 %s143, 1
          %s915 = smul.addr %s914, 64
          %s916 = scalar_lea.vmem [#allocation4], %s915
          %917 = dma.done %s913, 1024
        $region128: #{tpu_custom_call.1} parent=123 // pred_fallthru
          _
      $region124: #{tpu_custom_call.1} parent=5 // pred_fallthru
        _
    $region6: #{tpu_custom_call.1} parent=1 // loop_footer
      %s18 = sadd.s32 1, %s14
    $region7: #{tpu_custom_call.1} parent=1 // loop_footer_branch
      %13 = sbr.rel target = $region3
    $region8: #{tpu_custom_call.1} parent=1 // loop_exit
      _
    %918 = vsyncpa [#allocation5], 1
    %s919 = scalar_lea.sflag [#allocation5], 1
    %920 = vsyncpa %s919, 1

</llo_original>
